<compile_context>
chip_gen: v7x
topology: tpu7x:2x2x1
jax: 0.10.0
libtpu: 0.0.40
codegen_flags: <defaults>
</compile_context>

<pallas_src>
import math
from functools import partial

import jax
import jax.numpy as jnp
from jax.experimental import pallas as pl
from jax.experimental.pallas import tpu as pltpu

HIDDEN = 16        # Head's fixed hidden width: nn.Linear(Input_dims, 16)
TB_SLAB = 256      # slab rows per grid step (= TB_SLAB * P batch rows per tile)


def head_kernel(x_ref, w1_ref, b1_ref, w2_ref, b2_ref, o_ref):
    # matches `x = x.float()`
    x = x_ref[...].astype(jnp.float32)

    # linear_1 + ReLU   (MXU matmul, f32 accumulation; bias/ReLU on VPU)
    h = jnp.dot(x, w1_ref[...], preferred_element_type=jnp.float32) + b1_ref[...]
    h = jnp.maximum(h, 0.0)

    # linear_2 + ReLU
    y = jnp.dot(h, w2_ref[...], preferred_element_type=jnp.float32) + b2_ref[...]
    y = jnp.maximum(y, 0.0)

    # tanh (EUP slot — free under the DMA-bound regime)
    o_ref[...] = jnp.tanh(y).astype(o_ref.dtype)


def _block_diag(w, p):
    """Replicate (k, n) weight p times along the diagonal -> (p*k, p*n)."""
    k, n = w.shape
    eye = jnp.eye(p, dtype=w.dtype)
    return (eye[:, None, :, None] * w[None, :, None, :]).reshape(p * k, p * n)


@partial(jax.jit, static_argnames=("tb_slab",))
def head_forward(x, w1, b1, w2, b2, *, tb_slab=TB_SLAB):
    """Pallas forward for Head.

    x : (B, D_in)     any float dtype (cast to f32 in-kernel, like x.float())
    w1: (D_in, 16)    f32  (transpose of the torch weight)
    b1: (1, 16)       f32
    w2: (16, D_out)   f32  (transpose of the torch weight)
    b2: (1, D_out)    f32
    returns (B, D_out) f32
    """
    B, d_in = x.shape
    hidden = w1.shape[1]
    d_out = w2.shape[1]

    # Packing factor: P * d_out is a multiple of 128 -> lane-dense output stores.
    p = min(128 // math.gcd(128, d_out), 64)

    # Pad the batch so every grid block is full (bounded overhead: < tb_slab*p rows).
    b_s = pl.cdiv(B, p)                 # slab rows
    tb_s = min(tb_slab, b_s)            # slab rows per tile (full extent if small)
    b_s_pad = pl.cdiv(b_s, tb_s) * tb_s
    rows_pad = b_s_pad * p
    if rows_pad != B:
        x = jnp.pad(x, ((0, rows_pad - B), (0, 0)))

    # Free contiguous reshape: pack P batch rows per slab row.
    x_slab = x.reshape(b_s_pad, p * d_in)

    # Block-diagonal weight replication (tiny; built once outside the kernel and
    # held VMEM-resident by the constant-index BlockSpecs below).
    w1_big = _block_diag(w1.astype(jnp.float32), p)                       # (p*D_in, p*16)
    b1_big = jnp.tile(b1.astype(jnp.float32).reshape(1, hidden), (1, p))  # (1, p*16)
    w2_big = _block_diag(w2.astype(jnp.float32), p)                       # (p*16, p*D_out)
    b2_big = jnp.tile(b2.astype(jnp.float32).reshape(1, d_out), (1, p))   # (1, p*D_out)

    grid = (b_s_pad // tb_s,)

    itemsize = x_slab.dtype.itemsize
    cost = pl.CostEstimate(
        flops=2 * rows_pad * (d_in * hidden + hidden * d_out),
        transcendentals=rows_pad * d_out,
        bytes_accessed=(x_slab.size * itemsize
                        + b_s_pad * p * d_out * 4
                        + (w1_big.size + w2_big.size + b1_big.size + b2_big.size) * 4),
    )

    out_slab = pl.pallas_call(
        head_kernel,
        out_shape=jax.ShapeDtypeStruct((b_s_pad, p * d_out), jnp.float32),
        grid=grid,
        in_specs=[
            pl.BlockSpec((tb_s, p * d_in), lambda i: (i, 0)),   # streamed x tiles
            pl.BlockSpec(w1_big.shape, lambda i: (0, 0)),       # resident weights
            pl.BlockSpec(b1_big.shape, lambda i: (0, 0)),
            pl.BlockSpec(w2_big.shape, lambda i: (0, 0)),
            pl.BlockSpec(b2_big.shape, lambda i: (0, 0)),
        ],
        out_specs=pl.BlockSpec((tb_s, p * d_out), lambda i: (i, 0)),
        compiler_params=pltpu.CompilerParams(
            dimension_semantics=("parallel",),   # shards across TCs on v7x
        ),
        cost_estimate=cost,
    )(x_slab, w1_big, b1_big, w2_big, b2_big)

    # Unpack: (b_s_pad, p*d_out) row-major is exactly (b_s_pad*p, d_out); drop padding.
    return out_slab.reshape(b_s_pad * p, d_out)[:B]


def init_head_params(key, input_dims, output_dims, hidden=HIDDEN):
    """Torch nn.Linear default init (U[-1/sqrt(fan_in), 1/sqrt(fan_in)]), pre-transposed."""
    k1, k2, k3, k4 = jax.random.split(key, 4)
    bound1 = 1.0 / jnp.sqrt(float(input_dims))
    bound2 = 1.0 / jnp.sqrt(float(hidden))
    w1 = jax.random.uniform(k1, (input_dims, hidden), jnp.float32, -bound1, bound1)
    b1 = jax.random.uniform(k2, (1, hidden), jnp.float32, -bound1, bound1)
    w2 = jax.random.uniform(k3, (hidden, output_dims), jnp.float32, -bound2, bound2)
    b2 = jax.random.uniform(k4, (1, output_dims), jnp.float32, -bound2, bound2)
    return w1, b1, w2, b2


def head_reference(x, w1, b1, w2, b2):
    """Pure-JAX reference of the PyTorch forward."""
    x = x.astype(jnp.float32)
    h = jax.nn.relu(x @ w1 + b1)
    y = jax.nn.relu(h @ w2 + b2)
    return jnp.tanh(y)


if __name__ == "__main__":
    key = jax.random.PRNGKey(0)
    k_x, k_x2, k_p = jax.random.split(key, 3)

    # Head(Input_dims=32, Output_dims=8)
    D_in, D_out = 32, 8
    w1, b1, w2, b2 = init_head_params(k_p, D_in, D_out)

    # Small case (exercises batch padding + single-block path).
    B = 50
    x = jax.random.normal(k_x, (B, D_in), jnp.float32)
    out = jax.block_until_ready(head_forward(x, w1, b1, w2, b2))
    ref = head_reference(x, w1, b1, w2, b2)
    assert out.shape == (B, D_out), out.shape
    assert jnp.allclose(out, ref, atol=2e-5, rtol=2e-5), "mismatch vs reference (small)"

    # Larger case (exercises the multi-tile pipelined grid path).
    B2 = 5000
    x2 = jax.random.normal(k_x2, (B2, D_in), jnp.float32)
    out2 = jax.block_until_ready(head_forward(x2, w1, b1, w2, b2))
    ref2 = head_reference(x2, w1, b1, w2, b2)
    assert out2.shape == (B2, D_out), out2.shape
    assert jnp.allclose(out2, ref2, atol=2e-5, rtol=2e-5), "mismatch vs reference (tiled)"

    print("KERNEL_OK")
</pallas_src>

<mosaic_0001>
module attributes {stable_mosaic.version = 11 : i64} {
  func.func @head_kernel(%arg0: i32, %arg1: memref<4x512xf32, #tpu.memory_space<vmem>>, %arg2: memref<512x256xf32, #tpu.memory_space<vmem>>, %arg3: memref<1x256xf32, #tpu.memory_space<vmem>>, %arg4: memref<256x128xf32, #tpu.memory_space<vmem>>, %arg5: memref<1x128xf32, #tpu.memory_space<vmem>>, %arg6: memref<4x128xf32, #tpu.memory_space<vmem>>) attributes {dimension_semantics = [#tpu.dimension_semantics<parallel>], iteration_bounds = array<i64: 1>, scalar_prefetch = 0 : i64, scratch_operands = 0 : i64, tpu.core_type = #tpu.core_type<tc>, window_params = [{transform_indices = @transform_0, window_bounds = array<i64: 4, 512>}, {pipeline_mode = #tpu.pipeline_mode<synchronous>, transform_indices = @transform_1, window_bounds = array<i64: 512, 256>}, {pipeline_mode = #tpu.pipeline_mode<synchronous>, transform_indices = @transform_2, window_bounds = array<i64: 1, 256>}, {pipeline_mode = #tpu.pipeline_mode<synchronous>, transform_indices = @transform_3, window_bounds = array<i64: 256, 128>}, {pipeline_mode = #tpu.pipeline_mode<synchronous>, transform_indices = @transform_4, window_bounds = array<i64: 1, 128>}, {transform_indices = @transform_5, window_bounds = array<i64: 4, 128>}]} {
    %c0 = arith.constant 0 : index
    %c0_0 = arith.constant 0 : index
    %0 = vector.load %arg1[%c0, %c0_0] : memref<4x512xf32, #tpu.memory_space<vmem>>, vector<4x512xf32>
    %c0_1 = arith.constant 0 : index
    %c0_2 = arith.constant 0 : index
    %1 = vector.load %arg2[%c0_1, %c0_2] : memref<512x256xf32, #tpu.memory_space<vmem>>, vector<512x256xf32>
    %cst = arith.constant dense<0.000000e+00> : vector<4x256xf32>
    %2 = tpu.matmul %0, %1, %cst {dimension_numbers = #tpu.dot_dimension_numbers<[1], [0], [0], [1], [0, 0, 1, 1], [], []>} : vector<4x512xf32>, vector<512x256xf32>, vector<4x256xf32> -> vector<4x256xf32>
    %c0_3 = arith.constant 0 : index
    %c0_4 = arith.constant 0 : index
    %3 = vector.load %arg3[%c0_3, %c0_4] : memref<1x256xf32, #tpu.memory_space<vmem>>, vector<1x256xf32>
    %4 = vector.broadcast %3 : vector<1x256xf32> to vector<4x256xf32>
    %5 = arith.addf %2, %4 : vector<4x256xf32>
    %cst_5 = arith.constant 0.000000e+00 : f32
    %6 = vector.broadcast %cst_5 : f32 to vector<4x256xf32>
    %7 = arith.maximumf %5, %6 : vector<4x256xf32>
    %c0_6 = arith.constant 0 : index
    %c0_7 = arith.constant 0 : index
    %8 = vector.load %arg4[%c0_6, %c0_7] : memref<256x128xf32, #tpu.memory_space<vmem>>, vector<256x128xf32>
    %cst_8 = arith.constant dense<0.000000e+00> : vector<4x128xf32>
    %9 = tpu.matmul %7, %8, %cst_8 {dimension_numbers = #tpu.dot_dimension_numbers<[1], [0], [0], [1], [0, 0, 1, 1], [], []>} : vector<4x256xf32>, vector<256x128xf32>, vector<4x128xf32> -> vector<4x128xf32>
    %c0_9 = arith.constant 0 : index
    %c0_10 = arith.constant 0 : index
    %10 = vector.load %arg5[%c0_9, %c0_10] : memref<1x128xf32, #tpu.memory_space<vmem>>, vector<1x128xf32>
    %11 = vector.broadcast %10 : vector<1x128xf32> to vector<4x128xf32>
    %12 = arith.addf %9, %11 : vector<4x128xf32>
    %cst_11 = arith.constant 0.000000e+00 : f32
    %13 = vector.broadcast %cst_11 : f32 to vector<4x128xf32>
    %14 = arith.maximumf %12, %13 : vector<4x128xf32>
    %15 = math.tanh %14 : vector<4x128xf32>
    %c0_12 = arith.constant 0 : index
    %c0_13 = arith.constant 0 : index
    %16 = vector.load %arg6[%c0_12, %c0_13] : memref<4x128xf32, #tpu.memory_space<vmem>>, vector<4x128xf32>
    tpu.vector_store %arg6[%c0_12, %c0_13], %15 {strides = array<i32>} : memref<4x128xf32, #tpu.memory_space<vmem>>, vector<4x128xf32>,
    return
  }
  func.func @transform_0(%arg0: i32) -> (i32, i32) {
    %c0_i32 = arith.constant 0 : i32
    %c0_i32_0 = arith.constant 0 : i32
    return %arg0, %c0_i32 : i32, i32
  }
  func.func @transform_1(%arg0: i32) -> (i32, i32) {
    %c0_i32 = arith.constant 0 : i32
    %c0_i32_0 = arith.constant 0 : i32
    %c0_i32_1 = arith.constant 0 : i32
    return %c0_i32, %c0_i32_0 : i32, i32
  }
  func.func @transform_2(%arg0: i32) -> (i32, i32) {
    %c0_i32 = arith.constant 0 : i32
    %c0_i32_0 = arith.constant 0 : i32
    %c0_i32_1 = arith.constant 0 : i32
    return %c0_i32, %c0_i32_0 : i32, i32
  }
  func.func @transform_3(%arg0: i32) -> (i32, i32) {
    %c0_i32 = arith.constant 0 : i32
    %c0_i32_0 = arith.constant 0 : i32
    %c0_i32_1 = arith.constant 0 : i32
    return %c0_i32, %c0_i32_0 : i32, i32
  }
  func.func @transform_4(%arg0: i32) -> (i32, i32) {
    %c0_i32 = arith.constant 0 : i32
    %c0_i32_0 = arith.constant 0 : i32
    %c0_i32_1 = arith.constant 0 : i32
    return %c0_i32, %c0_i32_0 : i32, i32
  }
  func.func @transform_5(%arg0: i32) -> (i32, i32) {
    %c0_i32 = arith.constant 0 : i32
    %c0_i32_0 = arith.constant 0 : i32
    return %arg0, %c0_i32 : i32, i32
  }
}

</mosaic_0001>

<llo_original>
// kernel: head_forward.1
$region0: #{head_forward.1}
  #allocation0 [shape = 'u32[]', space=smem, size = 0x4, offset = 0x4, fixed_abs, tag = 'smem constant byte address 0x4 - core index']
  #allocation1 [shape = 'u32[144,128]{1,0:T(1,128)}', space=vmem, size = 0x12000, scoped, tag = 'internal scratch']
  %s0 = inlined_call_operand.vmem [shape: f32[4,512], index: 0, kind: input, shape index: {}]
  %s1 = inlined_call_operand.vmem [shape: f32[512,256], index: 1, kind: input, shape index: {}]
  %s2 = inlined_call_operand.vmem [shape: f32[1,256], index: 2, kind: input, shape index: {}]
  %s3 = inlined_call_operand.vmem [shape: f32[256,128], index: 3, kind: input, shape index: {}]
  %s4 = inlined_call_operand.vmem [shape: f32[1,128], index: 4, kind: input, shape index: {}]
  %s5 = inlined_call_operand.vmem [shape: f32[4,128], index: 5, kind: output, shape index: {}]
  %s6 = sld [smem:[#allocation0]]
  $region30: #{head_forward.1} parent=0
    _
  %s8 = ssub.s32 1, %s6
  %s9 = scalar_select 0, %s8, %s6
  // Predicated region
  $region2: #{head_forward.1} parent=0 // pred_check
    _
  $region3: #{head_forward.1} parent=0 // pred_check_branch
    %11 = sbr.rel (0) target = $region5
  $region4: #{head_forward.1} parent=0 // pred_region
    _
  $region5: #{head_forward.1} parent=0 // pred_fallthru
    _
  // Predicated region
  $region6: #{head_forward.1} parent=0 // pred_check
    _
  $region7: #{head_forward.1} parent=0 // pred_check_branch
    %13 = sbr.rel (0) target = $region9
  $region8: #{head_forward.1} parent=0 // pred_region
    _
  $region9: #{head_forward.1} parent=0 // pred_fallthru
    _
  // Predicated region
  $region10: #{head_forward.1} parent=0 // pred_check
    _
  $region11: #{head_forward.1} parent=0 // pred_check_branch
    %15 = sbr.rel (0) target = $region13
  $region12: #{head_forward.1} parent=0 // pred_region
    _
  $region13: #{head_forward.1} parent=0 // pred_fallthru
    _
  // Predicated region
  $region14: #{head_forward.1} parent=0 // pred_check
    _
  $region15: #{head_forward.1} parent=0 // pred_check_branch
    %17 = sbr.rel (0) target = $region17
  $region16: #{head_forward.1} parent=0 // pred_region
    _
  $region17: #{head_forward.1} parent=0 // pred_fallthru
    _
  // Predicated region
  $region18: #{head_forward.1} parent=0 // pred_check
    _
  $region19: #{head_forward.1} parent=0 // pred_check_branch
    %19 = sbr.rel (0) target = $region21
  $region20: #{head_forward.1} parent=0 // pred_region
    _
  $region21: #{head_forward.1} parent=0 // pred_fallthru
    _
  %v20 = vld [vmem:[%s0] sm:$0xff]
  %v21 = vld [vmem:[%s0 + $0x8] sm:$0xff]
  %v22 = vld [vmem:[%s1] sm:$0xff]
  %v23 = vld [vmem:[%s1 + $0x8] sm:$0xff]
  %v24 = vld [vmem:[%s1 + $0x10] sm:$0xff]
  %v25 = vld [vmem:[%s1 + $0x18] sm:$0xff]
  %v26 = vld [vmem:[%s1 + $0x20] sm:$0xff]
  %v27 = vld [vmem:[%s1 + $0x28] sm:$0xff]
  %v28 = vld [vmem:[%s1 + $0x30] sm:$0xff]
  %v29 = vld [vmem:[%s1 + $0x38] sm:$0xff]
  %v30 = vld [vmem:[%s1 + $0x40] sm:$0xff]
  %v31 = vld [vmem:[%s1 + $0x48] sm:$0xff]
  %v32 = vld [vmem:[%s1 + $0x50] sm:$0xff]
  %v33 = vld [vmem:[%s1 + $0x58] sm:$0xff]
  %v34 = vld [vmem:[%s1 + $0x60] sm:$0xff]
  %v35 = vld [vmem:[%s1 + $0x68] sm:$0xff]
  %v36 = vld [vmem:[%s1 + $0x70] sm:$0xff]
  %v37 = vld [vmem:[%s1 + $0x78] sm:$0xff]
  %v38 = vld [vmem:[%s1 + $0x80] sm:$0xff]
  %v39 = vld [vmem:[%s1 + $0x88] sm:$0xff]
  %v40 = vld [vmem:[%s1 + $0x90] sm:$0xff]
  %v41 = vld [vmem:[%s1 + $0x98] sm:$0xff]
  %v42 = vld [vmem:[%s1 + $0xa0] sm:$0xff]
  %v43 = vld [vmem:[%s1 + $0xa8] sm:$0xff]
  %v44 = vld [vmem:[%s1 + $0xb0] sm:$0xff]
  %v45 = vld [vmem:[%s1 + $0xb8] sm:$0xff]
  %v46 = vld [vmem:[%s1 + $0xc0] sm:$0xff]
  %v47 = vld [vmem:[%s1 + $0xc8] sm:$0xff]
  %v48 = vld [vmem:[%s1 + $0xd0] sm:$0xff]
  %v49 = vld [vmem:[%s1 + $0xd8] sm:$0xff]
  %v50 = vld [vmem:[%s1 + $0xe0] sm:$0xff]
  %v51 = vld [vmem:[%s1 + $0xe8] sm:$0xff]
  %v52 = vld [vmem:[%s1 + $0xf0] sm:$0xff]
  %v53 = vld [vmem:[%s1 + $0xf8] sm:$0xff]
  %v54 = vld [vmem:[%s1 + $0x100] sm:$0xff]
  %v55 = vld [vmem:[%s1 + $0x108] sm:$0xff]
  %v56 = vld [vmem:[%s1 + $0x110] sm:$0xff]
  %v57 = vld [vmem:[%s1 + $0x118] sm:$0xff]
  %v58 = vld [vmem:[%s1 + $0x120] sm:$0xff]
  %v59 = vld [vmem:[%s1 + $0x128] sm:$0xff]
  %v60 = vld [vmem:[%s1 + $0x130] sm:$0xff]
  %v61 = vld [vmem:[%s1 + $0x138] sm:$0xff]
  %v62 = vld [vmem:[%s1 + $0x140] sm:$0xff]
  %v63 = vld [vmem:[%s1 + $0x148] sm:$0xff]
  %v64 = vld [vmem:[%s1 + $0x150] sm:$0xff]
  %v65 = vld [vmem:[%s1 + $0x158] sm:$0xff]
  %v66 = vld [vmem:[%s1 + $0x160] sm:$0xff]
  %v67 = vld [vmem:[%s1 + $0x168] sm:$0xff]
  %v68 = vld [vmem:[%s1 + $0x170] sm:$0xff]
  %v69 = vld [vmem:[%s1 + $0x178] sm:$0xff]
  %v70 = vld [vmem:[%s1 + $0x180] sm:$0xff]
  %v71 = vld [vmem:[%s1 + $0x188] sm:$0xff]
  %v72 = vld [vmem:[%s1 + $0x190] sm:$0xff]
  %v73 = vld [vmem:[%s1 + $0x198] sm:$0xff]
  %v74 = vld [vmem:[%s1 + $0x1a0] sm:$0xff]
  %v75 = vld [vmem:[%s1 + $0x1a8] sm:$0xff]
  %v76 = vld [vmem:[%s1 + $0x1b0] sm:$0xff]
  %v77 = vld [vmem:[%s1 + $0x1b8] sm:$0xff]
  %v78 = vld [vmem:[%s1 + $0x1c0] sm:$0xff]
  %v79 = vld [vmem:[%s1 + $0x1c8] sm:$0xff]
  %v80 = vld [vmem:[%s1 + $0x1d0] sm:$0xff]
  %v81 = vld [vmem:[%s1 + $0x1d8] sm:$0xff]
  %v82 = vld [vmem:[%s1 + $0x1e0] sm:$0xff]
  %v83 = vld [vmem:[%s1 + $0x1e8] sm:$0xff]
  %v84 = vld [vmem:[%s1 + $0x1f0] sm:$0xff]
  %v85 = vld [vmem:[%s1 + $0x1f8] sm:$0xff]
  %v86 = vld [vmem:[%s1 + $0x200] sm:$0xff]
  %v87 = vld [vmem:[%s1 + $0x208] sm:$0xff]
  %v88 = vld [vmem:[%s1 + $0x210] sm:$0xff]
  %v89 = vld [vmem:[%s1 + $0x218] sm:$0xff]
  %v90 = vld [vmem:[%s1 + $0x220] sm:$0xff]
  %v91 = vld [vmem:[%s1 + $0x228] sm:$0xff]
  %v92 = vld [vmem:[%s1 + $0x230] sm:$0xff]
  %v93 = vld [vmem:[%s1 + $0x238] sm:$0xff]
  %v94 = vld [vmem:[%s1 + $0x240] sm:$0xff]
  %v95 = vld [vmem:[%s1 + $0x248] sm:$0xff]
  %v96 = vld [vmem:[%s1 + $0x250] sm:$0xff]
  %v97 = vld [vmem:[%s1 + $0x258] sm:$0xff]
  %v98 = vld [vmem:[%s1 + $0x260] sm:$0xff]
  %v99 = vld [vmem:[%s1 + $0x268] sm:$0xff]
  %v100 = vld [vmem:[%s1 + $0x270] sm:$0xff]
  %v101 = vld [vmem:[%s1 + $0x278] sm:$0xff]
  %v102 = vld [vmem:[%s1 + $0x280] sm:$0xff]
  %v103 = vld [vmem:[%s1 + $0x288] sm:$0xff]
  %v104 = vld [vmem:[%s1 + $0x290] sm:$0xff]
  %v105 = vld [vmem:[%s1 + $0x298] sm:$0xff]
  %v106 = vld [vmem:[%s1 + $0x2a0] sm:$0xff]
  %v107 = vld [vmem:[%s1 + $0x2a8] sm:$0xff]
  %v108 = vld [vmem:[%s1 + $0x2b0] sm:$0xff]
  %v109 = vld [vmem:[%s1 + $0x2b8] sm:$0xff]
  %v110 = vld [vmem:[%s1 + $0x2c0] sm:$0xff]
  %v111 = vld [vmem:[%s1 + $0x2c8] sm:$0xff]
  %v112 = vld [vmem:[%s1 + $0x2d0] sm:$0xff]
  %v113 = vld [vmem:[%s1 + $0x2d8] sm:$0xff]
  %v114 = vld [vmem:[%s1 + $0x2e0] sm:$0xff]
  %v115 = vld [vmem:[%s1 + $0x2e8] sm:$0xff]
  %v116 = vld [vmem:[%s1 + $0x2f0] sm:$0xff]
  %v117 = vld [vmem:[%s1 + $0x2f8] sm:$0xff]
  %v118 = vld [vmem:[%s1 + $0x300] sm:$0xff]
  %v119 = vld [vmem:[%s1 + $0x308] sm:$0xff]
  %v120 = vld [vmem:[%s1 + $0x310] sm:$0xff]
  %v121 = vld [vmem:[%s1 + $0x318] sm:$0xff]
  %v122 = vld [vmem:[%s1 + $0x320] sm:$0xff]
  %v123 = vld [vmem:[%s1 + $0x328] sm:$0xff]
  %v124 = vld [vmem:[%s1 + $0x330] sm:$0xff]
  %v125 = vld [vmem:[%s1 + $0x338] sm:$0xff]
  %v126 = vld [vmem:[%s1 + $0x340] sm:$0xff]
  %v127 = vld [vmem:[%s1 + $0x348] sm:$0xff]
  %v128 = vld [vmem:[%s1 + $0x350] sm:$0xff]
  %v129 = vld [vmem:[%s1 + $0x358] sm:$0xff]
  %v130 = vld [vmem:[%s1 + $0x360] sm:$0xff]
  %v131 = vld [vmem:[%s1 + $0x368] sm:$0xff]
  %v132 = vld [vmem:[%s1 + $0x370] sm:$0xff]
  %v133 = vld [vmem:[%s1 + $0x378] sm:$0xff]
  %v134 = vld [vmem:[%s1 + $0x380] sm:$0xff]
  %v135 = vld [vmem:[%s1 + $0x388] sm:$0xff]
  %v136 = vld [vmem:[%s1 + $0x390] sm:$0xff]
  %v137 = vld [vmem:[%s1 + $0x398] sm:$0xff]
  %v138 = vld [vmem:[%s1 + $0x3a0] sm:$0xff]
  %v139 = vld [vmem:[%s1 + $0x3a8] sm:$0xff]
  %v140 = vld [vmem:[%s1 + $0x3b0] sm:$0xff]
  %v141 = vld [vmem:[%s1 + $0x3b8] sm:$0xff]
  %v142 = vld [vmem:[%s1 + $0x3c0] sm:$0xff]
  %v143 = vld [vmem:[%s1 + $0x3c8] sm:$0xff]
  %v144 = vld [vmem:[%s1 + $0x3d0] sm:$0xff]
  %v145 = vld [vmem:[%s1 + $0x3d8] sm:$0xff]
  %v146 = vld [vmem:[%s1 + $0x3e0] sm:$0xff]
  %v147 = vld [vmem:[%s1 + $0x3e8] sm:$0xff]
  %v148 = vld [vmem:[%s1 + $0x3f0] sm:$0xff]
  %v149 = vld [vmem:[%s1 + $0x3f8] sm:$0xff]
  %v150 = vld [vmem:[%s2] sm:$0x3]
  %v152 = vlaneseq
  %v153 = vshrl.u32 %v152, 7
  %v154 = vsub.s32 0, %v153
  %v155 = vrot.slane %v150, %v154
  %v156 = vlaneseq
  %v157 = vshrl.u32 %v156, 7
  %v158 = vsub.s32 1, %v157
  %v159 = vrot.slane %v150, %v158
  %v164 = vcombine.high %v20, %v20
  %v165 = vcombine.high %v21, %v21
  %168 = vmatprep.subr.mxu0 %v23
  %169 = vmatpush1.msra.mxu0 %v22
  %170 = vmatprep.subr.mxu0 %v25
  %171 = vmatpush1.msra.mxu0 %v24
  %172 = vmatprep.subr.mxu0 %v27
  %173 = vmatpush1.msra.mxu0 %v26
  %174 = vmatprep.subr.mxu0 %v29
  %175 = vmatpush1.msra.mxu0 %v28
  %176 = vmatprep.subr.mxu0 %v31
  %177 = vmatpush1.msra.mxu0 %v30
  %178 = vmatprep.subr.mxu0 %v33
  %179 = vmatpush1.msra.mxu0 %v32
  %180 = vmatprep.subr.mxu0 %v35
  %181 = vmatpush1.msra.mxu0 %v34
  %182 = vmatprep.subr.mxu0 %v37
  %183 = vmatpush1.msra.mxu0 %v36
  %184 = vmatprep.subr.mxu0 %v39
  %185 = vmatpush1.msra.mxu0 %v38
  %186 = vmatprep.subr.mxu0 %v41
  %187 = vmatpush1.msra.mxu0 %v40
  %188 = vmatprep.subr.mxu0 %v43
  %189 = vmatpush1.msra.mxu0 %v42
  %190 = vmatprep.subr.mxu0 %v45
  %191 = vmatpush1.msra.mxu0 %v44
  %192 = vmatprep.subr.mxu0 %v47
  %193 = vmatpush1.msra.mxu0 %v46
  %194 = vmatprep.subr.mxu0 %v49
  %195 = vmatpush1.msra.mxu0 %v48
  %196 = vmatprep.subr.mxu0 %v51
  %197 = vmatpush1.msra.mxu0 %v50
  %198 = vmatprep.subr.mxu0 %v53
  %199 = vmatpush1.msra.mxu0 %v52
  %200 = vmatprep.subr.mxu0 %v55
  %201 = vmatpush1.msra.mxu0 %v54
  %202 = vmatprep.subr.mxu0 %v57
  %203 = vmatpush1.msra.mxu0 %v56
  %204 = vmatprep.subr.mxu0 %v59
  %205 = vmatpush1.msra.mxu0 %v58
  %206 = vmatprep.subr.mxu0 %v61
  %207 = vmatpush1.msra.mxu0 %v60
  %208 = vmatprep.subr.mxu0 %v63
  %209 = vmatpush1.msra.mxu0 %v62
  %210 = vmatprep.subr.mxu0 %v65
  %211 = vmatpush1.msra.mxu0 %v64
  %212 = vmatprep.subr.mxu0 %v67
  %213 = vmatpush1.msra.mxu0 %v66
  %214 = vmatprep.subr.mxu0 %v69
  %215 = vmatpush1.msra.mxu0 %v68
  %216 = vmatprep.subr.mxu0 %v71
  %217 = vmatpush1.msra.mxu0 %v70
  %218 = vmatprep.subr.mxu0 %v73
  %219 = vmatpush1.msra.mxu0 %v72
  %220 = vmatprep.subr.mxu0 %v75
  %221 = vmatpush1.msra.mxu0 %v74
  %222 = vmatprep.subr.mxu0 %v77
  %223 = vmatpush1.msra.mxu0 %v76
  %224 = vmatprep.subr.mxu0 %v79
  %225 = vmatpush1.msra.mxu0 %v78
  %226 = vmatprep.subr.mxu0 %v81
  %227 = vmatpush1.msra.mxu0 %v80
  %228 = vmatprep.subr.mxu0 %v83
  %229 = vmatpush1.msra.mxu0 %v82
  %230 = vmatprep.subr.mxu0 %v85
  %231 = vmatpush1.msra.mxu0 %v84
  %232 = vmatprep.mubr.f32.mxu0 %v164
  %233 = vmatmul.mubr.f32.gmra.mrb[0].mxu0 %v20
  %v234 = vpop.f32.mrb[0].mxu0
  %v235 = vadd.f32 %v155, %v234
  %v236 = vpop.f32.mrb[0].mxu0
  %v237 = vadd.f32 %v159, %v236
  %238 = vdwg.mxu0
  %239 = vmatprep.subr.mxu0 %v87
  %240 = vmatpush1.msra.mxu0 %v86
  %241 = vmatprep.subr.mxu0 %v89
  %242 = vmatpush1.msra.mxu0 %v88
  %243 = vmatprep.subr.mxu0 %v91
  %244 = vmatpush1.msra.mxu0 %v90
  %245 = vmatprep.subr.mxu0 %v93
  %246 = vmatpush1.msra.mxu0 %v92
  %247 = vmatprep.subr.mxu0 %v95
  %248 = vmatpush1.msra.mxu0 %v94
  %249 = vmatprep.subr.mxu0 %v97
  %250 = vmatpush1.msra.mxu0 %v96
  %251 = vmatprep.subr.mxu0 %v99
  %252 = vmatpush1.msra.mxu0 %v98
  %253 = vmatprep.subr.mxu0 %v101
  %254 = vmatpush1.msra.mxu0 %v100
  %255 = vmatprep.subr.mxu0 %v103
  %256 = vmatpush1.msra.mxu0 %v102
  %257 = vmatprep.subr.mxu0 %v105
  %258 = vmatpush1.msra.mxu0 %v104
  %259 = vmatprep.subr.mxu0 %v107
  %260 = vmatpush1.msra.mxu0 %v106
  %261 = vmatprep.subr.mxu0 %v109
  %262 = vmatpush1.msra.mxu0 %v108
  %263 = vmatprep.subr.mxu0 %v111
  %264 = vmatpush1.msra.mxu0 %v110
  %265 = vmatprep.subr.mxu0 %v113
  %266 = vmatpush1.msra.mxu0 %v112
  %267 = vmatprep.subr.mxu0 %v115
  %268 = vmatpush1.msra.mxu0 %v114
  %269 = vmatprep.subr.mxu0 %v117
  %270 = vmatpush1.msra.mxu0 %v116
  %271 = vmatprep.subr.mxu0 %v119
  %272 = vmatpush1.msra.mxu0 %v118
  %273 = vmatprep.subr.mxu0 %v121
  %274 = vmatpush1.msra.mxu0 %v120
  %275 = vmatprep.subr.mxu0 %v123
  %276 = vmatpush1.msra.mxu0 %v122
  %277 = vmatprep.subr.mxu0 %v125
  %278 = vmatpush1.msra.mxu0 %v124
  %279 = vmatprep.subr.mxu0 %v127
  %280 = vmatpush1.msra.mxu0 %v126
  %281 = vmatprep.subr.mxu0 %v129
  %282 = vmatpush1.msra.mxu0 %v128
  %283 = vmatprep.subr.mxu0 %v131
  %284 = vmatpush1.msra.mxu0 %v130
  %285 = vmatprep.subr.mxu0 %v133
  %286 = vmatpush1.msra.mxu0 %v132
  %287 = vmatprep.subr.mxu0 %v135
  %288 = vmatpush1.msra.mxu0 %v134
  %289 = vmatprep.subr.mxu0 %v137
  %290 = vmatpush1.msra.mxu0 %v136
  %291 = vmatprep.subr.mxu0 %v139
  %292 = vmatpush1.msra.mxu0 %v138
  %293 = vmatprep.subr.mxu0 %v141
  %294 = vmatpush1.msra.mxu0 %v140
  %295 = vmatprep.subr.mxu0 %v143
  %296 = vmatpush1.msra.mxu0 %v142
  %297 = vmatprep.subr.mxu0 %v145
  %298 = vmatpush1.msra.mxu0 %v144
  %299 = vmatprep.subr.mxu0 %v147
  %300 = vmatpush1.msra.mxu0 %v146
  %301 = vmatprep.subr.mxu0 %v149
  %302 = vmatpush1.msra.mxu0 %v148
  %303 = vmatprep.mubr.f32.mxu0 %v165
  %304 = vmatmul.mubr.f32.gmra.mrb[0].mxu0 %v21
  %v305 = vpop.f32.mrb[0].mxu0
  %v306 = vadd.f32 %v235, %v305
  %v307 = vpop.f32.mrb[0].mxu0
  %v308 = vadd.f32 %v237, %v307
  %309 = vdwg.mxu0
  %v310 = vmax.f32 %v306, 0.0
  %v311 = vmax.f32 %v308, 0.0
  %v312 = vld [vmem:[%s3] sm:$0xff]
  %v313 = vld [vmem:[%s3 + $0x8] sm:$0xff]
  %v314 = vld [vmem:[%s3 + $0x10] sm:$0xff]
  %v315 = vld [vmem:[%s3 + $0x18] sm:$0xff]
  %v316 = vld [vmem:[%s3 + $0x20] sm:$0xff]
  %v317 = vld [vmem:[%s3 + $0x28] sm:$0xff]
  %v318 = vld [vmem:[%s3 + $0x30] sm:$0xff]
  %v319 = vld [vmem:[%s3 + $0x38] sm:$0xff]
  %v320 = vld [vmem:[%s3 + $0x40] sm:$0xff]
  %v321 = vld [vmem:[%s3 + $0x48] sm:$0xff]
  %v322 = vld [vmem:[%s3 + $0x50] sm:$0xff]
  %v323 = vld [vmem:[%s3 + $0x58] sm:$0xff]
  %v324 = vld [vmem:[%s3 + $0x60] sm:$0xff]
  %v325 = vld [vmem:[%s3 + $0x68] sm:$0xff]
  %v326 = vld [vmem:[%s3 + $0x70] sm:$0xff]
  %v327 = vld [vmem:[%s3 + $0x78] sm:$0xff]
  %v328 = vld [vmem:[%s3 + $0x80] sm:$0xff]
  %v329 = vld [vmem:[%s3 + $0x88] sm:$0xff]
  %v330 = vld [vmem:[%s3 + $0x90] sm:$0xff]
  %v331 = vld [vmem:[%s3 + $0x98] sm:$0xff]
  %v332 = vld [vmem:[%s3 + $0xa0] sm:$0xff]
  %v333 = vld [vmem:[%s3 + $0xa8] sm:$0xff]
  %v334 = vld [vmem:[%s3 + $0xb0] sm:$0xff]
  %v335 = vld [vmem:[%s3 + $0xb8] sm:$0xff]
  %v336 = vld [vmem:[%s3 + $0xc0] sm:$0xff]
  %v337 = vld [vmem:[%s3 + $0xc8] sm:$0xff]
  %v338 = vld [vmem:[%s3 + $0xd0] sm:$0xff]
  %v339 = vld [vmem:[%s3 + $0xd8] sm:$0xff]
  %v340 = vld [vmem:[%s3 + $0xe0] sm:$0xff]
  %v341 = vld [vmem:[%s3 + $0xe8] sm:$0xff]
  %v342 = vld [vmem:[%s3 + $0xf0] sm:$0xff]
  %v343 = vld [vmem:[%s3 + $0xf8] sm:$0xff]
  %v344 = vld [vmem:[%s4] sm:$0x1]
  %v346 = vlaneseq
  %v347 = vshrl.u32 %v346, 7
  %v348 = vsub.s32 0, %v347
  %v349 = vrot.slane %v344, %v348
  %351 = vmatprep.subr.mxu0 0.0
  %352 = vmatpush1.msra.mxu0 %v312
  %353 = vmatprep.subr.mxu0 0.0
  %354 = vmatpush1.msra.mxu0 %v313
  %355 = vmatprep.subr.mxu0 0.0
  %356 = vmatpush1.msra.mxu0 %v314
  %357 = vmatprep.subr.mxu0 0.0
  %358 = vmatpush1.msra.mxu0 %v315
  %359 = vmatprep.subr.mxu0 0.0
  %360 = vmatpush1.msra.mxu0 %v316
  %361 = vmatprep.subr.mxu0 0.0
  %362 = vmatpush1.msra.mxu0 %v317
  %363 = vmatprep.subr.mxu0 0.0
  %364 = vmatpush1.msra.mxu0 %v318
  %365 = vmatprep.subr.mxu0 0.0
  %366 = vmatpush1.msra.mxu0 %v319
  %367 = vmatprep.subr.mxu0 0.0
  %368 = vmatpush1.msra.mxu0 %v320
  %369 = vmatprep.subr.mxu0 0.0
  %370 = vmatpush1.msra.mxu0 %v321
  %371 = vmatprep.subr.mxu0 0.0
  %372 = vmatpush1.msra.mxu0 %v322
  %373 = vmatprep.subr.mxu0 0.0
  %374 = vmatpush1.msra.mxu0 %v323
  %375 = vmatprep.subr.mxu0 0.0
  %376 = vmatpush1.msra.mxu0 %v324
  %377 = vmatprep.subr.mxu0 0.0
  %378 = vmatpush1.msra.mxu0 %v325
  %379 = vmatprep.subr.mxu0 0.0
  %380 = vmatpush1.msra.mxu0 %v326
  %381 = vmatprep.subr.mxu0 0.0
  %382 = vmatpush1.msra.mxu0 %v327
  %383 = vmatprep.subr.mxu0 0.0
  %384 = vmatpush1.msra.mxu0 %v328
  %385 = vmatprep.subr.mxu0 0.0
  %386 = vmatpush1.msra.mxu0 %v329
  %387 = vmatprep.subr.mxu0 0.0
  %388 = vmatpush1.msra.mxu0 %v330
  %389 = vmatprep.subr.mxu0 0.0
  %390 = vmatpush1.msra.mxu0 %v331
  %391 = vmatprep.subr.mxu0 0.0
  %392 = vmatpush1.msra.mxu0 %v332
  %393 = vmatprep.subr.mxu0 0.0
  %394 = vmatpush1.msra.mxu0 %v333
  %395 = vmatprep.subr.mxu0 0.0
  %396 = vmatpush1.msra.mxu0 %v334
  %397 = vmatprep.subr.mxu0 0.0
  %398 = vmatpush1.msra.mxu0 %v335
  %399 = vmatprep.subr.mxu0 0.0
  %400 = vmatpush1.msra.mxu0 %v336
  %401 = vmatprep.subr.mxu0 0.0
  %402 = vmatpush1.msra.mxu0 %v337
  %403 = vmatprep.subr.mxu0 0.0
  %404 = vmatpush1.msra.mxu0 %v338
  %405 = vmatprep.subr.mxu0 0.0
  %406 = vmatpush1.msra.mxu0 %v339
  %407 = vmatprep.subr.mxu0 0.0
  %408 = vmatpush1.msra.mxu0 %v340
  %409 = vmatprep.subr.mxu0 0.0
  %410 = vmatpush1.msra.mxu0 %v341
  %411 = vmatprep.subr.mxu0 0.0
  %412 = vmatpush1.msra.mxu0 %v342
  %413 = vmatprep.subr.mxu0 0.0
  %414 = vmatpush1.msra.mxu0 %v343
  %415 = vmatprep.mubr.f32.mxu0 %v311
  %416 = vmatmul.mubr.f32.gmra.mrb[0].mxu0 %v310
  %v417 = vpop.f32.mrb[0].mxu0
  %v418 = vadd.f32 %v349, %v417
  %v419 = vpop.f32.mrb[0].mxu0
  %420 = vdwg.mxu0
  %v421 = vmax.f32 %v418, 0.0
  %v422 = vtanh.pop %v421
  %423 = vst [vmem:[%s5] sm:$0xf] %v422
  // Predicated region
  $region22: #{head_forward.1} parent=0 // pred_check
    _
  $region23: #{head_forward.1} parent=0 // pred_check_branch
    %425 = sbr.rel (0) target = $region25
  $region24: #{head_forward.1} parent=0 // pred_region
    _
  $region25: #{head_forward.1} parent=0 // pred_fallthru
    _
  // Predicated region
  $region26: #{head_forward.1} parent=0 // pred_check
    _
  $region27: #{head_forward.1} parent=0 // pred_check_branch
    %427 = sbr.rel (0) target = $region29
  $region28: #{head_forward.1} parent=0 // pred_region
    _
  $region29: #{head_forward.1} parent=0 // pred_fallthru
    _

</llo_original>
